<compile_context>
chip_gen: v7x
topology: tpu7x:2x2x1
jax: 0.10.0
libtpu: 0.0.40
codegen_flags: <defaults>
</compile_context>

<pallas_src>
import jax
import jax.numpy as jnp
import numpy as np
from jax.experimental import pallas as pl
from jax.experimental.pallas import tpu as pltpu

CAM = 512        # config.CAM_pixel_num (must be >= 434 for the hard-coded regions)
NCLASS = 10      # config.nClass (module writes coeffs 0..9 into the mask)
TH = 256         # row tile: 0.5 MiB f32 blocks, lane-dense (W = 512)

# (row_start, row_end, col_start, col_end, class_index) -- exactly the slices
# assigned in DeCoModel.initDeciMask, applied in the same order (regions are
# disjoint, so order is immaterial here but preserved anyway).
REGIONS = (
    (99, 179,  99, 179, 0),
    (99, 179, 219, 299, 1),
    (99, 179, 339, 419, 2),
    (219, 299,  84, 164, 3),
    (219, 299, 174, 254, 4),
    (219, 299, 264, 344, 5),
    (219, 299, 354, 434, 6),
    (339, 419,  99, 179, 7),
    (339, 419, 219, 299, 8),
    (339, 419, 339, 419, 9),
)


def build_decision_mask(decision_coeff):
    """initDeciMask: ones(CAM, CAM) with 10 rectangles set to coeff[k]."""
    mask = jnp.ones((CAM, CAM), jnp.float32)
    for (r0, r1, c0, c1, k) in REGIONS:
        mask = mask.at[r0:r1, c0:c1].set(decision_coeff[k].astype(jnp.float32))
    return mask


def deco_kernel(mask_ref, x_ref, o_ref):
    # mask_ref: VMEM (TH, CAM) f32 — resident across the inner (batch) grid axis.
    # x_ref / o_ref: VMEM (TH, CAM) f32 tiles (batch dim squeezed by BlockSpec).
    o_ref[...] = mask_ref[...] * x_ref[...]


def deco_forward(decision_coeff, x, state="train"):
    """Pallas equivalent of DeCoModel.forward(config, x, state)."""
    if state == "accu":
        # TODO(synk): DetectRegion() is not defined in the provided module; only
        # the 'train' branch (mask * x) is implemented.
        raise NotImplementedError("DetectRegion is not defined in the source module")

    B, H, W = x.shape
    assert H == CAM and W == CAM and H % TH == 0

    mask = build_decision_mask(decision_coeff)

    return pl.pallas_call(
        deco_kernel,
        out_shape=jax.ShapeDtypeStruct((B, H, W), jnp.float32),
        grid=(H // TH, B),                       # batch innermost -> mask resident
        in_specs=[
            pl.BlockSpec((TH, W), lambda i, b: (i, 0)),        # mask: row tile only
            pl.BlockSpec((None, TH, W), lambda i, b: (b, i, 0)),  # x: squeeze batch
        ],
        out_specs=pl.BlockSpec((None, TH, W), lambda i, b: (b, i, 0)),
        compiler_params=pltpu.CompilerParams(
            dimension_semantics=("parallel", "arbitrary")),
    )(mask, x)


def deco_reference(decision_coeff, x):
    """Pure-JAX reference reproducing the PyTorch forward (state='train')."""
    return build_decision_mask(decision_coeff) * x


if __name__ == "__main__":
    # Deterministic parameter init: the module inits decisionCoeff to ones;
    # add a small per-class offset so the multiply is non-trivial.
    decision_coeff = jnp.asarray(1.0 + 0.1 * np.arange(NCLASS), dtype=jnp.float32)

    key = jax.random.PRNGKey(0)
    B = 2
    x = jax.random.normal(key, (B, CAM, CAM), dtype=jnp.float32)

    out = deco_forward(decision_coeff, x, state="train")
    out = jax.block_until_ready(out)

    ref = deco_reference(decision_coeff, x)
    np.testing.assert_allclose(np.asarray(out), np.asarray(ref), rtol=1e-6, atol=1e-6)

    print("KERNEL_OK")
</pallas_src>

<mosaic_0001>
module attributes {stable_mosaic.version = 11 : i64} {
  func.func @deco_kernel(%arg0: i32, %arg1: i32, %arg2: memref<256x512xf32, #tpu.memory_space<vmem>>, %arg3: memref<1x256x512xf32, #tpu.memory_space<vmem>>, %arg4: memref<1x256x512xf32, #tpu.memory_space<vmem>>) attributes {dimension_semantics = [#tpu.dimension_semantics<parallel>, #tpu.dimension_semantics<arbitrary>], iteration_bounds = array<i64: 2, 2>, scalar_prefetch = 0 : i64, scratch_operands = 0 : i64, tpu.core_type = #tpu.core_type<tc>, window_params = [{transform_indices = @transform_0, window_bounds = array<i64: 256, 512>}, {transform_indices = @transform_1, window_bounds = array<i64: 1, 256, 512>}, {transform_indices = @transform_2, window_bounds = array<i64: 1, 256, 512>}]} {
    %c0 = arith.constant 0 : index
    %c0_0 = arith.constant 0 : index
    %0 = vector.load %arg2[%c0, %c0_0] : memref<256x512xf32, #tpu.memory_space<vmem>>, vector<256x512xf32>
    %c0_1 = arith.constant 0 : index
    %c0_2 = arith.constant 0 : index
    %c0_3 = arith.constant 0 : index
    %1 = vector.load %arg3[%c0_1, %c0_2, %c0_3] : memref<1x256x512xf32, #tpu.memory_space<vmem>>, vector<1x256x512xf32>
    %2 = vector.shape_cast %1 : vector<1x256x512xf32> to vector<256x512xf32>
    %3 = arith.mulf %0, %2 : vector<256x512xf32>
    %c0_4 = arith.constant 0 : index
    %c0_5 = arith.constant 0 : index
    %c0_6 = arith.constant 0 : index
    %4 = vector.load %arg4[%c0_4, %c0_5, %c0_6] : memref<1x256x512xf32, #tpu.memory_space<vmem>>, vector<1x256x512xf32>
    %5 = vector.shape_cast %4 : vector<1x256x512xf32> to vector<256x512xf32>
    %6 = vector.shape_cast %3 : vector<256x512xf32> to vector<1x256x512xf32>
    tpu.vector_store %arg4[%c0_4, %c0_5, %c0_6], %6 {strides = array<i32>} : memref<1x256x512xf32, #tpu.memory_space<vmem>>, vector<1x256x512xf32>,
    return
  }
  func.func @transform_0(%arg0: i32, %arg1: i32) -> (i32, i32) {
    %c0_i32 = arith.constant 0 : i32
    %c0_i32_0 = arith.constant 0 : i32
    return %arg0, %c0_i32 : i32, i32
  }
  func.func @transform_1(%arg0: i32, %arg1: i32) -> (i32, i32, i32) {
    %c0_i32 = arith.constant 0 : i32
    %c0_i32_0 = arith.constant 0 : i32
    return %arg1, %arg0, %c0_i32 : i32, i32, i32
  }
  func.func @transform_2(%arg0: i32, %arg1: i32) -> (i32, i32, i32) {
    %c0_i32 = arith.constant 0 : i32
    %c0_i32_0 = arith.constant 0 : i32
    return %arg1, %arg0, %c0_i32 : i32, i32, i32
  }
}

</mosaic_0001>

<llo_original>
// kernel: tpu_custom_call.1
$region0: #{tpu_custom_call.1}
  #allocation0 [shape = 'u32[]', space=smem, size = 0x4, offset = 0x4, fixed_abs, tag = 'smem constant byte address 0x4 - core index']
  #allocation1 [shape = 'u32[144,128]{1,0:T(1,128)}', space=vmem, size = 0x12000, scoped, tag = 'internal scratch']
  %s0 = inlined_call_operand.hbm [shape: f32[512,512], index: 0, kind: input, shape index: {}]
  %s1 = inlined_call_operand.hbm [shape: f32[2,512,512], index: 1, kind: input, shape index: {}]
  %s2 = inlined_call_operand.hbm [shape: f32[2,512,512], index: 2, kind: output, shape index: {}]
  %s3 = sld [smem:[#allocation0]]
  $region49: #{tpu_custom_call.1} parent=0
    _
  %s5 = ssub.s32 1, %s3
  %s6 = scalar_select 0, %s5, %s3
  $region1: #{tpu_custom_call.1} parent=0
    #allocation2 [shape = 'u8[1048576]{0}', space=vmem, size = 0x100000, scoped, tag = 'input window, operand 0']
    #allocation3 [shape = 's32[2]{0}', space=sflag, size = 0x8, scoped, tag = 'scoped memory for tpu_custom_call.1']
    #allocation4 [shape = 's32[2]{0}', space=sflag, size = 0x8, scoped, tag = 'scoped memory for tpu_custom_call.1']
    #allocation5 [shape = 'u8[1048576]{0}', space=vmem, size = 0x100000, scoped, tag = 'input window, operand 1']
    #allocation6 [shape = 's32[2]{0}', space=sflag, size = 0x8, scoped, tag = 'scoped memory for tpu_custom_call.1']
    #allocation7 [shape = 'u8[1048576]{0}', space=vmem, size = 0x100000, scoped, tag = 'output window, operand 0']
    %7 = vsyncpa [#allocation3], 0
    %s8 = scalar_lea.sflag [#allocation3], 1
    %9 = vsyncpa %s8, 0
    %10 = vsyncpa [#allocation6], 0
    %s11 = scalar_lea.sflag [#allocation6], 1
    %12 = vsyncpa %s11, 0
    %13 = vsyncpa [#allocation4], 0
    %s14 = scalar_lea.sflag [#allocation4], 1
    %15 = vsyncpa %s14, 0
    loop: start=0, step=1, limit=6
    $region2: #{tpu_custom_call.1} parent=1 // loop_pre_header
      _
    $region3: #{tpu_custom_call.1} parent=1 // loop_header
      %s17 = sphi 0, %s21
      %p18 = scmp.ge.s32.totalorder %s17, 6
      %s24 = sphi 0, %s36
      %s25 = sphi 0, %s32
      %s26 = sphi 0, %s24
      %s27 = sphi 0, %s25
      %s28 = sphi 0, %s26
      %s29 = sphi 0, %s27
      %s39 = sphi 0, %s41
      %s42 = sphi 0, %s39
      %s43 = sphi 0, %s42
      %s59 = sphi 0, %s43
      %s67 = sphi 0, %s69
      %s70 = sphi 0, %s67
      %s71 = sphi 0, %s70
      %s87 = sphi 0, %s71
      %s95 = sphi 0, %s97
      %s98 = sphi 0, %s95
      %s99 = sphi 0, %s98
      %s115 = sphi 0, %s99
    $region4: #{tpu_custom_call.1} parent=1 // loop_header_branch
      %20 = sbr.rel (%p18) target = $region8
    $region5: #{tpu_custom_call.1} parent=1 // loop_body
      %s22 = ssub.s32 %s17, 1
      %s23 = ssub.s32 %s17, 2
      %s30 = sadd.s32 1, %s25
      %p31 = scmp.ge.s32.totalorder %s30, 2
      %s32 = scalar_select %p31, 0, %s30
      %s33 = sadd.s32 1, %s24
      %s34 = scalar_select %p31, %s33, %s24
      %p35 = scmp.ge.s32.totalorder %s34, 2
      %s36 = scalar_select %p35, 0, %s34
      %s37 = ssub.s32 %s24, %s36
      %p38 = scmp.eq.s32.totalorder %s37, 0
      %s40 = sadd.s32 %s39, 1
      %s41 = scalar_select %p38, %s39, %s40
      %p44 = pneg %p38
      %p45 = scmp.eq.s32.totalorder %s17, 3
      %p46 = por %p44, %p45
      %p47 = scmp.ne.s32.totalorder %s39, %s42
      %p48 = scmp.eq.s32.totalorder %s17, 0
      %p49 = por %p47, %p48
      %p50 = scmp.ne.s32.totalorder %s39, %s42
      %p51 = scmp.eq.s32.totalorder %s22, 3
      %p52 = por %p50, %p51
      %p53 = scmp.ne.s32.totalorder %s42, %s43
      %p54 = scmp.eq.s32.totalorder %s22, 0
      %p55 = por %p53, %p54
      %p56 = scmp.ne.s32.totalorder %s42, %s43
      %p57 = scmp.eq.s32.totalorder %s23, 3
      %p58 = por %p56, %p57
      %p60 = scmp.ne.s32.totalorder %s43, %s59
      %p61 = scmp.eq.s32.totalorder %s23, 0
      %p62 = por %p60, %p61
      %s63 = ssub.s32 %s25, %s32
      %s64 = ssub.s32 %s24, %s36
      %s65 = sor.u32 %s63, %s64
      %p66 = scmp.eq.s32.totalorder %s65, 0
      %s68 = sadd.s32 %s67, 1
      %s69 = scalar_select %p66, %s67, %s68
      %p72 = pneg %p66
      %p73 = scmp.eq.s32.totalorder %s17, 3
      %p74 = por %p72, %p73
      %p75 = scmp.ne.s32.totalorder %s67, %s70
      %p76 = scmp.eq.s32.totalorder %s17, 0
      %p77 = por %p75, %p76
      %p78 = scmp.ne.s32.totalorder %s67, %s70
      %p79 = scmp.eq.s32.totalorder %s22, 3
      %p80 = por %p78, %p79
      %p81 = scmp.ne.s32.totalorder %s70, %s71
      %p82 = scmp.eq.s32.totalorder %s22, 0
      %p83 = por %p81, %p82
      %p84 = scmp.ne.s32.totalorder %s70, %s71
      %p85 = scmp.eq.s32.totalorder %s23, 3
      %p86 = por %p84, %p85
      %p88 = scmp.ne.s32.totalorder %s71, %s87
      %p89 = scmp.eq.s32.totalorder %s23, 0
      %p90 = por %p88, %p89
      %s91 = ssub.s32 %s25, %s32
      %s92 = ssub.s32 %s24, %s36
      %s93 = sor.u32 %s91, %s92
      %p94 = scmp.eq.s32.totalorder %s93, 0
      %s96 = sadd.s32 %s95, 1
      %s97 = scalar_select %p94, %s95, %s96
      %p100 = pneg %p94
      %p101 = scmp.eq.s32.totalorder %s17, 3
      %p102 = por %p100, %p101
      %p103 = scmp.ne.s32.totalorder %s95, %s98
      %p104 = scmp.eq.s32.totalorder %s17, 0
      %p105 = por %p103, %p104
      %p106 = scmp.ne.s32.totalorder %s95, %s98
      %p107 = scmp.eq.s32.totalorder %s22, 3
      %p108 = por %p106, %p107
      %p109 = scmp.ne.s32.totalorder %s98, %s99
      %p110 = scmp.eq.s32.totalorder %s22, 0
      %p111 = por %p109, %p110
      %p112 = scmp.ne.s32.totalorder %s98, %s99
      %p113 = scmp.eq.s32.totalorder %s23, 3
      %p114 = por %p112, %p113
      %p116 = scmp.ne.s32.totalorder %s99, %s115
      %p117 = scmp.eq.s32.totalorder %s23, 0
      %p118 = por %p116, %p117
      %p119 = scmp.le.s32.totalorder 1, %s17
      %p120 = scmp.lt.s32.totalorder %s17, 5
      %p121 = pnand %p119, %p120
      %p122 = pneg %p121
      // Predicated region
      $region9: #{tpu_custom_call.1} parent=5 // pred_check
        _
      $region10: #{tpu_custom_call.1} parent=5 // pred_check_branch
        %124 = sbr.rel (%p121) target = $region12
      $region11: #{tpu_custom_call.1} parent=5 // pred_region
        %s125 = ssub.s32 %s17, 1
      $region12: #{tpu_custom_call.1} parent=5 // pred_fallthru
        _
      %p126 = scmp.lt.s32.totalorder %s17, 4
      // Predicated region
      $region13: #{tpu_custom_call.1} parent=5 // pred_check
        %p127 = pneg %p126
      $region14: #{tpu_custom_call.1} parent=5 // pred_check_branch
        %129 = sbr.rel (%p127) target = $region16
      $region15: #{tpu_custom_call.1} parent=5 // pred_region
        // Predicated region
        $region17: #{tpu_custom_call.1} parent=15 // pred_check
          %p130 = pneg %p49
        $region18: #{tpu_custom_call.1} parent=15 // pred_check_branch
          %132 = sbr.rel (%p130) target = $region20
        $region19: #{tpu_custom_call.1} parent=15 // pred_region
          %s133 = sand.u32 %s39, 1
          %s134 = scalar_lea.sflag [#allocation3], %s133
          %s135 = sand.u32 %s39, 1
          %s136 = smul.addr %s135, 1024
          %s137 = scalar_lea.vmem [#allocation2], %s136
          %s138 = smul.u32 32, %s24
          %s140 = ssub.s32 16384, 16384
          %141 = vsyncadd %s134, %s140
          %s142 = smul.addr %s138, 4
          %s143 = smul.addr %s142, 128
          %s144 = scalar_lea.hbm %s0, %s143
          %s145 = sshll.u32 %s137, 4
          %s146 = int_to_ptr.vmem [resolvable:$true] %s145
          %151 = dma.hbm_to_vmem [thread:$0]  %s144, 16384, %s146, %s134, 512, 512, 32
        $region20: #{tpu_custom_call.1} parent=15 // pred_fallthru
          _
        // Predicated region
        $region21: #{tpu_custom_call.1} parent=15 // pred_check
          %p152 = pneg %p77
        $region22: #{tpu_custom_call.1} parent=15 // pred_check_branch
          %154 = sbr.rel (%p152) target = $region24
        $region23: #{tpu_custom_call.1} parent=15 // pred_region
          %s155 = sand.u32 %s67, 1
          %s156 = scalar_lea.sflag [#allocation6], %s155
          %s157 = sand.u32 %s67, 1
          %s158 = smul.addr %s157, 1024
          %s159 = scalar_lea.vmem [#allocation5], %s158
          %s160 = smul.u32 32, %s24
          %s162 = ssub.s32 16384, 16384
          %163 = vsyncadd %s156, %s162
          %s164 = smul.addr %s160, 4
          %s165 = smul.addr %s25, 256
          %s166 = sadd.s32 %s164, %s165
          %s167 = smul.addr %s166, 128
          %s168 = scalar_lea.hbm %s1, %s167
          %s169 = sshll.u32 %s159, 4
          %s170 = int_to_ptr.vmem [resolvable:$true] %s169
          %175 = dma.hbm_to_vmem [thread:$0]  %s168, 16384, %s170, %s156, 512, 512, 32
        $region24: #{tpu_custom_call.1} parent=15 // pred_fallthru
          _
      $region16: #{tpu_custom_call.1} parent=5 // pred_fallthru
        _
      %p176 = scmp.le.s32.totalorder 1, %s17
      %p177 = scmp.lt.s32.totalorder %s17, 5
      %p178 = pnand %p176, %p177
      %p179 = pneg %p178
      // Predicated region
      $region25: #{tpu_custom_call.1} parent=5 // pred_check
        _
      $region26: #{tpu_custom_call.1} parent=5 // pred_check_branch
        %181 = sbr.rel (%p178) target = $region28
      $region27: #{tpu_custom_call.1} parent=5 // pred_region
        %s182 = ssub.s32 %s17, 1
        %s183 = sand.u32 %s42, 1
        %s184 = scalar_lea.sflag [#allocation3], %s183
        %s185 = sand.u32 %s42, 1
        %s186 = smul.addr %s185, 1024
        %s187 = scalar_lea.vmem [#allocation2], %s186
        // Predicated region
        $region29: #{tpu_custom_call.1} parent=27 // pred_check
          %p188 = pneg %p55
        $region30: #{tpu_custom_call.1} parent=27 // pred_check_branch
          %190 = sbr.rel (%p188) target = $region32
        $region31: #{tpu_custom_call.1} parent=27 // pred_region
          %191 = dma.done %s184, 16384
        $region32: #{tpu_custom_call.1} parent=27 // pred_fallthru
          _
        %s192 = sand.u32 %s70, 1
        %s193 = scalar_lea.sflag [#allocation6], %s192
        %s194 = sand.u32 %s70, 1
        %s195 = smul.addr %s194, 1024
        %s196 = scalar_lea.vmem [#allocation5], %s195
        // Predicated region
        $region33: #{tpu_custom_call.1} parent=27 // pred_check
          %p197 = pneg %p83
        $region34: #{tpu_custom_call.1} parent=27 // pred_check_branch
          %199 = sbr.rel (%p197) target = $region36
        $region35: #{tpu_custom_call.1} parent=27 // pred_region
          %200 = dma.done %s193, 16384
        $region36: #{tpu_custom_call.1} parent=27 // pred_fallthru
          _
        %s201 = sand.u32 %s42, 1
        %s202 = scalar_lea.sflag [#allocation3], %s201
        %s203 = sand.u32 %s42, 1
        %s204 = smul.addr %s203, 1024
        %s205 = scalar_lea.vmem [#allocation2], %s204
        %p206 = pneg %p55
        %p207 = pneg %p52
        %s208 = sand.u32 %s70, 1
        %s209 = scalar_lea.sflag [#allocation6], %s208
        %s210 = sand.u32 %s70, 1
        %s211 = smul.addr %s210, 1024
        %s212 = scalar_lea.vmem [#allocation5], %s211
        %p213 = pneg %p83
        %p214 = pneg %p80
        %p215 = pneg %p111
        %p216 = pneg %p108
        %s217 = sand.u32 %s98, 1
        %s218 = scalar_lea.sflag [#allocation4], %s217
        %s219 = sand.u32 %s98, 1
        %s220 = smul.addr %s219, 1024
        %s221 = scalar_lea.vmem [#allocation7], %s220
        %s222 = smul.u32 32, %s26
        %s223 = smul.u32 32, %s26
        %s224 = smul.u32 32, %s26
        %v225 = vld [vmem:[%s187] sm:$0xff]
        %v226 = vld [vmem:[%s187 + $0x8] sm:$0xff]
        %v227 = vld [vmem:[%s187 + $0x10] sm:$0xff]
        %v228 = vld [vmem:[%s187 + $0x18] sm:$0xff]
        %v229 = vld [vmem:[%s187 + $0x20] sm:$0xff]
        %v230 = vld [vmem:[%s187 + $0x28] sm:$0xff]
        %v231 = vld [vmem:[%s187 + $0x30] sm:$0xff]
        %v232 = vld [vmem:[%s187 + $0x38] sm:$0xff]
        %v233 = vld [vmem:[%s187 + $0x40] sm:$0xff]
        %v234 = vld [vmem:[%s187 + $0x48] sm:$0xff]
        %v235 = vld [vmem:[%s187 + $0x50] sm:$0xff]
        %v236 = vld [vmem:[%s187 + $0x58] sm:$0xff]
        %v237 = vld [vmem:[%s187 + $0x60] sm:$0xff]
        %v238 = vld [vmem:[%s187 + $0x68] sm:$0xff]
        %v239 = vld [vmem:[%s187 + $0x70] sm:$0xff]
        %v240 = vld [vmem:[%s187 + $0x78] sm:$0xff]
        %v241 = vld [vmem:[%s187 + $0x80] sm:$0xff]
        %v242 = vld [vmem:[%s187 + $0x88] sm:$0xff]
        %v243 = vld [vmem:[%s187 + $0x90] sm:$0xff]
        %v244 = vld [vmem:[%s187 + $0x98] sm:$0xff]
        %v245 = vld [vmem:[%s187 + $0xa0] sm:$0xff]
        %v246 = vld [vmem:[%s187 + $0xa8] sm:$0xff]
        %v247 = vld [vmem:[%s187 + $0xb0] sm:$0xff]
        %v248 = vld [vmem:[%s187 + $0xb8] sm:$0xff]
        %v249 = vld [vmem:[%s187 + $0xc0] sm:$0xff]
        %v250 = vld [vmem:[%s187 + $0xc8] sm:$0xff]
        %v251 = vld [vmem:[%s187 + $0xd0] sm:$0xff]
        %v252 = vld [vmem:[%s187 + $0xd8] sm:$0xff]
        %v253 = vld [vmem:[%s187 + $0xe0] sm:$0xff]
        %v254 = vld [vmem:[%s187 + $0xe8] sm:$0xff]
        %v255 = vld [vmem:[%s187 + $0xf0] sm:$0xff]
        %v256 = vld [vmem:[%s187 + $0xf8] sm:$0xff]
        %v257 = vld [vmem:[%s187 + $0x100] sm:$0xff]
        %v258 = vld [vmem:[%s187 + $0x108] sm:$0xff]
        %v259 = vld [vmem:[%s187 + $0x110] sm:$0xff]
        %v260 = vld [vmem:[%s187 + $0x118] sm:$0xff]
        %v261 = vld [vmem:[%s187 + $0x120] sm:$0xff]
        %v262 = vld [vmem:[%s187 + $0x128] sm:$0xff]
        %v263 = vld [vmem:[%s187 + $0x130] sm:$0xff]
        %v264 = vld [vmem:[%s187 + $0x138] sm:$0xff]
        %v265 = vld [vmem:[%s187 + $0x140] sm:$0xff]
        %v266 = vld [vmem:[%s187 + $0x148] sm:$0xff]
        %v267 = vld [vmem:[%s187 + $0x150] sm:$0xff]
        %v268 = vld [vmem:[%s187 + $0x158] sm:$0xff]
        %v269 = vld [vmem:[%s187 + $0x160] sm:$0xff]
        %v270 = vld [vmem:[%s187 + $0x168] sm:$0xff]
        %v271 = vld [vmem:[%s187 + $0x170] sm:$0xff]
        %v272 = vld [vmem:[%s187 + $0x178] sm:$0xff]
        %v273 = vld [vmem:[%s187 + $0x180] sm:$0xff]
        %v274 = vld [vmem:[%s187 + $0x188] sm:$0xff]
        %v275 = vld [vmem:[%s187 + $0x190] sm:$0xff]
        %v276 = vld [vmem:[%s187 + $0x198] sm:$0xff]
        %v277 = vld [vmem:[%s187 + $0x1a0] sm:$0xff]
        %v278 = vld [vmem:[%s187 + $0x1a8] sm:$0xff]
        %v279 = vld [vmem:[%s187 + $0x1b0] sm:$0xff]
        %v280 = vld [vmem:[%s187 + $0x1b8] sm:$0xff]
        %v281 = vld [vmem:[%s187 + $0x1c0] sm:$0xff]
        %v282 = vld [vmem:[%s187 + $0x1c8] sm:$0xff]
        %v283 = vld [vmem:[%s187 + $0x1d0] sm:$0xff]
        %v284 = vld [vmem:[%s187 + $0x1d8] sm:$0xff]
        %v285 = vld [vmem:[%s187 + $0x1e0] sm:$0xff]
        %v286 = vld [vmem:[%s187 + $0x1e8] sm:$0xff]
        %v287 = vld [vmem:[%s187 + $0x1f0] sm:$0xff]
        %v288 = vld [vmem:[%s187 + $0x1f8] sm:$0xff]
        %v289 = vld [vmem:[%s187 + $0x200] sm:$0xff]
        %v290 = vld [vmem:[%s187 + $0x208] sm:$0xff]
        %v291 = vld [vmem:[%s187 + $0x210] sm:$0xff]
        %v292 = vld [vmem:[%s187 + $0x218] sm:$0xff]
        %v293 = vld [vmem:[%s187 + $0x220] sm:$0xff]
        %v294 = vld [vmem:[%s187 + $0x228] sm:$0xff]
        %v295 = vld [vmem:[%s187 + $0x230] sm:$0xff]
        %v296 = vld [vmem:[%s187 + $0x238] sm:$0xff]
        %v297 = vld [vmem:[%s187 + $0x240] sm:$0xff]
        %v298 = vld [vmem:[%s187 + $0x248] sm:$0xff]
        %v299 = vld [vmem:[%s187 + $0x250] sm:$0xff]
        %v300 = vld [vmem:[%s187 + $0x258] sm:$0xff]
        %v301 = vld [vmem:[%s187 + $0x260] sm:$0xff]
        %v302 = vld [vmem:[%s187 + $0x268] sm:$0xff]
        %v303 = vld [vmem:[%s187 + $0x270] sm:$0xff]
        %v304 = vld [vmem:[%s187 + $0x278] sm:$0xff]
        %v305 = vld [vmem:[%s187 + $0x280] sm:$0xff]
        %v306 = vld [vmem:[%s187 + $0x288] sm:$0xff]
        %v307 = vld [vmem:[%s187 + $0x290] sm:$0xff]
        %v308 = vld [vmem:[%s187 + $0x298] sm:$0xff]
        %v309 = vld [vmem:[%s187 + $0x2a0] sm:$0xff]
        %v310 = vld [vmem:[%s187 + $0x2a8] sm:$0xff]
        %v311 = vld [vmem:[%s187 + $0x2b0] sm:$0xff]
        %v312 = vld [vmem:[%s187 + $0x2b8] sm:$0xff]
        %v313 = vld [vmem:[%s187 + $0x2c0] sm:$0xff]
        %v314 = vld [vmem:[%s187 + $0x2c8] sm:$0xff]
        %v315 = vld [vmem:[%s187 + $0x2d0] sm:$0xff]
        %v316 = vld [vmem:[%s187 + $0x2d8] sm:$0xff]
        %v317 = vld [vmem:[%s187 + $0x2e0] sm:$0xff]
        %v318 = vld [vmem:[%s187 + $0x2e8] sm:$0xff]
        %v319 = vld [vmem:[%s187 + $0x2f0] sm:$0xff]
        %v320 = vld [vmem:[%s187 + $0x2f8] sm:$0xff]
        %v321 = vld [vmem:[%s187 + $0x300] sm:$0xff]
        %v322 = vld [vmem:[%s187 + $0x308] sm:$0xff]
        %v323 = vld [vmem:[%s187 + $0x310] sm:$0xff]
        %v324 = vld [vmem:[%s187 + $0x318] sm:$0xff]
        %v325 = vld [vmem:[%s187 + $0x320] sm:$0xff]
        %v326 = vld [vmem:[%s187 + $0x328] sm:$0xff]
        %v327 = vld [vmem:[%s187 + $0x330] sm:$0xff]
        %v328 = vld [vmem:[%s187 + $0x338] sm:$0xff]
        %v329 = vld [vmem:[%s187 + $0x340] sm:$0xff]
        %v330 = vld [vmem:[%s187 + $0x348] sm:$0xff]
        %v331 = vld [vmem:[%s187 + $0x350] sm:$0xff]
        %v332 = vld [vmem:[%s187 + $0x358] sm:$0xff]
        %v333 = vld [vmem:[%s187 + $0x360] sm:$0xff]
        %v334 = vld [vmem:[%s187 + $0x368] sm:$0xff]
        %v335 = vld [vmem:[%s187 + $0x370] sm:$0xff]
        %v336 = vld [vmem:[%s187 + $0x378] sm:$0xff]
        %v337 = vld [vmem:[%s187 + $0x380] sm:$0xff]
        %v338 = vld [vmem:[%s187 + $0x388] sm:$0xff]
        %v339 = vld [vmem:[%s187 + $0x390] sm:$0xff]
        %v340 = vld [vmem:[%s187 + $0x398] sm:$0xff]
        %v341 = vld [vmem:[%s187 + $0x3a0] sm:$0xff]
        %v342 = vld [vmem:[%s187 + $0x3a8] sm:$0xff]
        %v343 = vld [vmem:[%s187 + $0x3b0] sm:$0xff]
        %v344 = vld [vmem:[%s187 + $0x3b8] sm:$0xff]
        %v345 = vld [vmem:[%s187 + $0x3c0] sm:$0xff]
        %v346 = vld [vmem:[%s187 + $0x3c8] sm:$0xff]
        %v347 = vld [vmem:[%s187 + $0x3d0] sm:$0xff]
        %v348 = vld [vmem:[%s187 + $0x3d8] sm:$0xff]
        %v349 = vld [vmem:[%s187 + $0x3e0] sm:$0xff]
        %v350 = vld [vmem:[%s187 + $0x3e8] sm:$0xff]
        %v351 = vld [vmem:[%s187 + $0x3f0] sm:$0xff]
        %v352 = vld [vmem:[%s187 + $0x3f8] sm:$0xff]
        %v353 = vld [vmem:[%s196] sm:$0xff]
        %v354 = vld [vmem:[%s196 + $0x8] sm:$0xff]
        %v355 = vld [vmem:[%s196 + $0x10] sm:$0xff]
        %v356 = vld [vmem:[%s196 + $0x18] sm:$0xff]
        %v357 = vld [vmem:[%s196 + $0x20] sm:$0xff]
        %v358 = vld [vmem:[%s196 + $0x28] sm:$0xff]
        %v359 = vld [vmem:[%s196 + $0x30] sm:$0xff]
        %v360 = vld [vmem:[%s196 + $0x38] sm:$0xff]
        %v361 = vld [vmem:[%s196 + $0x40] sm:$0xff]
        %v362 = vld [vmem:[%s196 + $0x48] sm:$0xff]
        %v363 = vld [vmem:[%s196 + $0x50] sm:$0xff]
        %v364 = vld [vmem:[%s196 + $0x58] sm:$0xff]
        %v365 = vld [vmem:[%s196 + $0x60] sm:$0xff]
        %v366 = vld [vmem:[%s196 + $0x68] sm:$0xff]
        %v367 = vld [vmem:[%s196 + $0x70] sm:$0xff]
        %v368 = vld [vmem:[%s196 + $0x78] sm:$0xff]
        %v369 = vld [vmem:[%s196 + $0x80] sm:$0xff]
        %v370 = vld [vmem:[%s196 + $0x88] sm:$0xff]
        %v371 = vld [vmem:[%s196 + $0x90] sm:$0xff]
        %v372 = vld [vmem:[%s196 + $0x98] sm:$0xff]
        %v373 = vld [vmem:[%s196 + $0xa0] sm:$0xff]
        %v374 = vld [vmem:[%s196 + $0xa8] sm:$0xff]
        %v375 = vld [vmem:[%s196 + $0xb0] sm:$0xff]
        %v376 = vld [vmem:[%s196 + $0xb8] sm:$0xff]
        %v377 = vld [vmem:[%s196 + $0xc0] sm:$0xff]
        %v378 = vld [vmem:[%s196 + $0xc8] sm:$0xff]
        %v379 = vld [vmem:[%s196 + $0xd0] sm:$0xff]
        %v380 = vld [vmem:[%s196 + $0xd8] sm:$0xff]
        %v381 = vld [vmem:[%s196 + $0xe0] sm:$0xff]
        %v382 = vld [vmem:[%s196 + $0xe8] sm:$0xff]
        %v383 = vld [vmem:[%s196 + $0xf0] sm:$0xff]
        %v384 = vld [vmem:[%s196 + $0xf8] sm:$0xff]
        %v385 = vld [vmem:[%s196 + $0x100] sm:$0xff]
        %v386 = vld [vmem:[%s196 + $0x108] sm:$0xff]
        %v387 = vld [vmem:[%s196 + $0x110] sm:$0xff]
        %v388 = vld [vmem:[%s196 + $0x118] sm:$0xff]
        %v389 = vld [vmem:[%s196 + $0x120] sm:$0xff]
        %v390 = vld [vmem:[%s196 + $0x128] sm:$0xff]
        %v391 = vld [vmem:[%s196 + $0x130] sm:$0xff]
        %v392 = vld [vmem:[%s196 + $0x138] sm:$0xff]
        %v393 = vld [vmem:[%s196 + $0x140] sm:$0xff]
        %v394 = vld [vmem:[%s196 + $0x148] sm:$0xff]
        %v395 = vld [vmem:[%s196 + $0x150] sm:$0xff]
        %v396 = vld [vmem:[%s196 + $0x158] sm:$0xff]
        %v397 = vld [vmem:[%s196 + $0x160] sm:$0xff]
        %v398 = vld [vmem:[%s196 + $0x168] sm:$0xff]
        %v399 = vld [vmem:[%s196 + $0x170] sm:$0xff]
        %v400 = vld [vmem:[%s196 + $0x178] sm:$0xff]
        %v401 = vld [vmem:[%s196 + $0x180] sm:$0xff]
        %v402 = vld [vmem:[%s196 + $0x188] sm:$0xff]
        %v403 = vld [vmem:[%s196 + $0x190] sm:$0xff]
        %v404 = vld [vmem:[%s196 + $0x198] sm:$0xff]
        %v405 = vld [vmem:[%s196 + $0x1a0] sm:$0xff]
        %v406 = vld [vmem:[%s196 + $0x1a8] sm:$0xff]
        %v407 = vld [vmem:[%s196 + $0x1b0] sm:$0xff]
        %v408 = vld [vmem:[%s196 + $0x1b8] sm:$0xff]
        %v409 = vld [vmem:[%s196 + $0x1c0] sm:$0xff]
        %v410 = vld [vmem:[%s196 + $0x1c8] sm:$0xff]
        %v411 = vld [vmem:[%s196 + $0x1d0] sm:$0xff]
        %v412 = vld [vmem:[%s196 + $0x1d8] sm:$0xff]
        %v413 = vld [vmem:[%s196 + $0x1e0] sm:$0xff]
        %v414 = vld [vmem:[%s196 + $0x1e8] sm:$0xff]
        %v415 = vld [vmem:[%s196 + $0x1f0] sm:$0xff]
        %v416 = vld [vmem:[%s196 + $0x1f8] sm:$0xff]
        %v417 = vld [vmem:[%s196 + $0x200] sm:$0xff]
        %v418 = vld [vmem:[%s196 + $0x208] sm:$0xff]
        %v419 = vld [vmem:[%s196 + $0x210] sm:$0xff]
        %v420 = vld [vmem:[%s196 + $0x218] sm:$0xff]
        %v421 = vld [vmem:[%s196 + $0x220] sm:$0xff]
        %v422 = vld [vmem:[%s196 + $0x228] sm:$0xff]
        %v423 = vld [vmem:[%s196 + $0x230] sm:$0xff]
        %v424 = vld [vmem:[%s196 + $0x238] sm:$0xff]
        %v425 = vld [vmem:[%s196 + $0x240] sm:$0xff]
        %v426 = vld [vmem:[%s196 + $0x248] sm:$0xff]
        %v427 = vld [vmem:[%s196 + $0x250] sm:$0xff]
        %v428 = vld [vmem:[%s196 + $0x258] sm:$0xff]
        %v429 = vld [vmem:[%s196 + $0x260] sm:$0xff]
        %v430 = vld [vmem:[%s196 + $0x268] sm:$0xff]
        %v431 = vld [vmem:[%s196 + $0x270] sm:$0xff]
        %v432 = vld [vmem:[%s196 + $0x278] sm:$0xff]
        %v433 = vld [vmem:[%s196 + $0x280] sm:$0xff]
        %v434 = vld [vmem:[%s196 + $0x288] sm:$0xff]
        %v435 = vld [vmem:[%s196 + $0x290] sm:$0xff]
        %v436 = vld [vmem:[%s196 + $0x298] sm:$0xff]
        %v437 = vld [vmem:[%s196 + $0x2a0] sm:$0xff]
        %v438 = vld [vmem:[%s196 + $0x2a8] sm:$0xff]
        %v439 = vld [vmem:[%s196 + $0x2b0] sm:$0xff]
        %v440 = vld [vmem:[%s196 + $0x2b8] sm:$0xff]
        %v441 = vld [vmem:[%s196 + $0x2c0] sm:$0xff]
        %v442 = vld [vmem:[%s196 + $0x2c8] sm:$0xff]
        %v443 = vld [vmem:[%s196 + $0x2d0] sm:$0xff]
        %v444 = vld [vmem:[%s196 + $0x2d8] sm:$0xff]
        %v445 = vld [vmem:[%s196 + $0x2e0] sm:$0xff]
        %v446 = vld [vmem:[%s196 + $0x2e8] sm:$0xff]
        %v447 = vld [vmem:[%s196 + $0x2f0] sm:$0xff]
        %v448 = vld [vmem:[%s196 + $0x2f8] sm:$0xff]
        %v449 = vld [vmem:[%s196 + $0x300] sm:$0xff]
        %v450 = vld [vmem:[%s196 + $0x308] sm:$0xff]
        %v451 = vld [vmem:[%s196 + $0x310] sm:$0xff]
        %v452 = vld [vmem:[%s196 + $0x318] sm:$0xff]
        %v453 = vld [vmem:[%s196 + $0x320] sm:$0xff]
        %v454 = vld [vmem:[%s196 + $0x328] sm:$0xff]
        %v455 = vld [vmem:[%s196 + $0x330] sm:$0xff]
        %v456 = vld [vmem:[%s196 + $0x338] sm:$0xff]
        %v457 = vld [vmem:[%s196 + $0x340] sm:$0xff]
        %v458 = vld [vmem:[%s196 + $0x348] sm:$0xff]
        %v459 = vld [vmem:[%s196 + $0x350] sm:$0xff]
        %v460 = vld [vmem:[%s196 + $0x358] sm:$0xff]
        %v461 = vld [vmem:[%s196 + $0x360] sm:$0xff]
        %v462 = vld [vmem:[%s196 + $0x368] sm:$0xff]
        %v463 = vld [vmem:[%s196 + $0x370] sm:$0xff]
        %v464 = vld [vmem:[%s196 + $0x378] sm:$0xff]
        %v465 = vld [vmem:[%s196 + $0x380] sm:$0xff]
        %v466 = vld [vmem:[%s196 + $0x388] sm:$0xff]
        %v467 = vld [vmem:[%s196 + $0x390] sm:$0xff]
        %v468 = vld [vmem:[%s196 + $0x398] sm:$0xff]
        %v469 = vld [vmem:[%s196 + $0x3a0] sm:$0xff]
        %v470 = vld [vmem:[%s196 + $0x3a8] sm:$0xff]
        %v471 = vld [vmem:[%s196 + $0x3b0] sm:$0xff]
        %v472 = vld [vmem:[%s196 + $0x3b8] sm:$0xff]
        %v473 = vld [vmem:[%s196 + $0x3c0] sm:$0xff]
        %v474 = vld [vmem:[%s196 + $0x3c8] sm:$0xff]
        %v475 = vld [vmem:[%s196 + $0x3d0] sm:$0xff]
        %v476 = vld [vmem:[%s196 + $0x3d8] sm:$0xff]
        %v477 = vld [vmem:[%s196 + $0x3e0] sm:$0xff]
        %v478 = vld [vmem:[%s196 + $0x3e8] sm:$0xff]
        %v479 = vld [vmem:[%s196 + $0x3f0] sm:$0xff]
        %v480 = vld [vmem:[%s196 + $0x3f8] sm:$0xff]
        %v481 = vmul.f32 %v225, %v353
        %v482 = vmul.f32 %v226, %v354
        %v483 = vmul.f32 %v227, %v355
        %v484 = vmul.f32 %v228, %v356
        %v485 = vmul.f32 %v229, %v357
        %v486 = vmul.f32 %v230, %v358
        %v487 = vmul.f32 %v231, %v359
        %v488 = vmul.f32 %v232, %v360
        %v489 = vmul.f32 %v233, %v361
        %v490 = vmul.f32 %v234, %v362
        %v491 = vmul.f32 %v235, %v363
        %v492 = vmul.f32 %v236, %v364
        %v493 = vmul.f32 %v237, %v365
        %v494 = vmul.f32 %v238, %v366
        %v495 = vmul.f32 %v239, %v367
        %v496 = vmul.f32 %v240, %v368
        %v497 = vmul.f32 %v241, %v369
        %v498 = vmul.f32 %v242, %v370
        %v499 = vmul.f32 %v243, %v371
        %v500 = vmul.f32 %v244, %v372
        %v501 = vmul.f32 %v245, %v373
        %v502 = vmul.f32 %v246, %v374
        %v503 = vmul.f32 %v247, %v375
        %v504 = vmul.f32 %v248, %v376
        %v505 = vmul.f32 %v249, %v377
        %v506 = vmul.f32 %v250, %v378
        %v507 = vmul.f32 %v251, %v379
        %v508 = vmul.f32 %v252, %v380
        %v509 = vmul.f32 %v253, %v381
        %v510 = vmul.f32 %v254, %v382
        %v511 = vmul.f32 %v255, %v383
        %v512 = vmul.f32 %v256, %v384
        %v513 = vmul.f32 %v257, %v385
        %v514 = vmul.f32 %v258, %v386
        %v515 = vmul.f32 %v259, %v387
        %v516 = vmul.f32 %v260, %v388
        %v517 = vmul.f32 %v261, %v389
        %v518 = vmul.f32 %v262, %v390
        %v519 = vmul.f32 %v263, %v391
        %v520 = vmul.f32 %v264, %v392
        %v521 = vmul.f32 %v265, %v393
        %v522 = vmul.f32 %v266, %v394
        %v523 = vmul.f32 %v267, %v395
        %v524 = vmul.f32 %v268, %v396
        %v525 = vmul.f32 %v269, %v397
        %v526 = vmul.f32 %v270, %v398
        %v527 = vmul.f32 %v271, %v399
        %v528 = vmul.f32 %v272, %v400
        %v529 = vmul.f32 %v273, %v401
        %v530 = vmul.f32 %v274, %v402
        %v531 = vmul.f32 %v275, %v403
        %v532 = vmul.f32 %v276, %v404
        %v533 = vmul.f32 %v277, %v405
        %v534 = vmul.f32 %v278, %v406
        %v535 = vmul.f32 %v279, %v407
        %v536 = vmul.f32 %v280, %v408
        %v537 = vmul.f32 %v281, %v409
        %v538 = vmul.f32 %v282, %v410
        %v539 = vmul.f32 %v283, %v411
        %v540 = vmul.f32 %v284, %v412
        %v541 = vmul.f32 %v285, %v413
        %v542 = vmul.f32 %v286, %v414
        %v543 = vmul.f32 %v287, %v415
        %v544 = vmul.f32 %v288, %v416
        %v545 = vmul.f32 %v289, %v417
        %v546 = vmul.f32 %v290, %v418
        %v547 = vmul.f32 %v291, %v419
        %v548 = vmul.f32 %v292, %v420
        %v549 = vmul.f32 %v293, %v421
        %v550 = vmul.f32 %v294, %v422
        %v551 = vmul.f32 %v295, %v423
        %v552 = vmul.f32 %v296, %v424
        %v553 = vmul.f32 %v297, %v425
        %v554 = vmul.f32 %v298, %v426
        %v555 = vmul.f32 %v299, %v427
        %v556 = vmul.f32 %v300, %v428
        %v557 = vmul.f32 %v301, %v429
        %v558 = vmul.f32 %v302, %v430
        %v559 = vmul.f32 %v303, %v431
        %v560 = vmul.f32 %v304, %v432
        %v561 = vmul.f32 %v305, %v433
        %v562 = vmul.f32 %v306, %v434
        %v563 = vmul.f32 %v307, %v435
        %v564 = vmul.f32 %v308, %v436
        %v565 = vmul.f32 %v309, %v437
        %v566 = vmul.f32 %v310, %v438
        %v567 = vmul.f32 %v311, %v439
        %v568 = vmul.f32 %v312, %v440
        %v569 = vmul.f32 %v313, %v441
        %v570 = vmul.f32 %v314, %v442
        %v571 = vmul.f32 %v315, %v443
        %v572 = vmul.f32 %v316, %v444
        %v573 = vmul.f32 %v317, %v445
        %v574 = vmul.f32 %v318, %v446
        %v575 = vmul.f32 %v319, %v447
        %v576 = vmul.f32 %v320, %v448
        %v577 = vmul.f32 %v321, %v449
        %v578 = vmul.f32 %v322, %v450
        %v579 = vmul.f32 %v323, %v451
        %v580 = vmul.f32 %v324, %v452
        %v581 = vmul.f32 %v325, %v453
        %v582 = vmul.f32 %v326, %v454
        %v583 = vmul.f32 %v327, %v455
        %v584 = vmul.f32 %v328, %v456
        %v585 = vmul.f32 %v329, %v457
        %v586 = vmul.f32 %v330, %v458
        %v587 = vmul.f32 %v331, %v459
        %v588 = vmul.f32 %v332, %v460
        %v589 = vmul.f32 %v333, %v461
        %v590 = vmul.f32 %v334, %v462
        %v591 = vmul.f32 %v335, %v463
        %v592 = vmul.f32 %v336, %v464
        %v593 = vmul.f32 %v337, %v465
        %v594 = vmul.f32 %v338, %v466
        %v595 = vmul.f32 %v339, %v467
        %v596 = vmul.f32 %v340, %v468
        %v597 = vmul.f32 %v341, %v469
        %v598 = vmul.f32 %v342, %v470
        %v599 = vmul.f32 %v343, %v471
        %v600 = vmul.f32 %v344, %v472
        %v601 = vmul.f32 %v345, %v473
        %v602 = vmul.f32 %v346, %v474
        %v603 = vmul.f32 %v347, %v475
        %v604 = vmul.f32 %v348, %v476
        %v605 = vmul.f32 %v349, %v477
        %v606 = vmul.f32 %v350, %v478
        %v607 = vmul.f32 %v351, %v479
        %v608 = vmul.f32 %v352, %v480
        %609 = vst [vmem:[%s221] sm:$0xff] %v481
        %610 = vst [vmem:[%s221 + $0x8] sm:$0xff] %v482
        %611 = vst [vmem:[%s221 + $0x10] sm:$0xff] %v483
        %612 = vst [vmem:[%s221 + $0x18] sm:$0xff] %v484
        %613 = vst [vmem:[%s221 + $0x20] sm:$0xff] %v485
        %614 = vst [vmem:[%s221 + $0x28] sm:$0xff] %v486
        %615 = vst [vmem:[%s221 + $0x30] sm:$0xff] %v487
        %616 = vst [vmem:[%s221 + $0x38] sm:$0xff] %v488
        %617 = vst [vmem:[%s221 + $0x40] sm:$0xff] %v489
        %618 = vst [vmem:[%s221 + $0x48] sm:$0xff] %v490
        %619 = vst [vmem:[%s221 + $0x50] sm:$0xff] %v491
        %620 = vst [vmem:[%s221 + $0x58] sm:$0xff] %v492
        %621 = vst [vmem:[%s221 + $0x60] sm:$0xff] %v493
        %622 = vst [vmem:[%s221 + $0x68] sm:$0xff] %v494
        %623 = vst [vmem:[%s221 + $0x70] sm:$0xff] %v495
        %624 = vst [vmem:[%s221 + $0x78] sm:$0xff] %v496
        %625 = vst [vmem:[%s221 + $0x80] sm:$0xff] %v497
        %626 = vst [vmem:[%s221 + $0x88] sm:$0xff] %v498
        %627 = vst [vmem:[%s221 + $0x90] sm:$0xff] %v499
        %628 = vst [vmem:[%s221 + $0x98] sm:$0xff] %v500
        %629 = vst [vmem:[%s221 + $0xa0] sm:$0xff] %v501
        %630 = vst [vmem:[%s221 + $0xa8] sm:$0xff] %v502
        %631 = vst [vmem:[%s221 + $0xb0] sm:$0xff] %v503
        %632 = vst [vmem:[%s221 + $0xb8] sm:$0xff] %v504
        %633 = vst [vmem:[%s221 + $0xc0] sm:$0xff] %v505
        %634 = vst [vmem:[%s221 + $0xc8] sm:$0xff] %v506
        %635 = vst [vmem:[%s221 + $0xd0] sm:$0xff] %v507
        %636 = vst [vmem:[%s221 + $0xd8] sm:$0xff] %v508
        %637 = vst [vmem:[%s221 + $0xe0] sm:$0xff] %v509
        %638 = vst [vmem:[%s221 + $0xe8] sm:$0xff] %v510
        %639 = vst [vmem:[%s221 + $0xf0] sm:$0xff] %v511
        %640 = vst [vmem:[%s221 + $0xf8] sm:$0xff] %v512
        %641 = vst [vmem:[%s221 + $0x100] sm:$0xff] %v513
        %642 = vst [vmem:[%s221 + $0x108] sm:$0xff] %v514
        %643 = vst [vmem:[%s221 + $0x110] sm:$0xff] %v515
        %644 = vst [vmem:[%s221 + $0x118] sm:$0xff] %v516
        %645 = vst [vmem:[%s221 + $0x120] sm:$0xff] %v517
        %646 = vst [vmem:[%s221 + $0x128] sm:$0xff] %v518
        %647 = vst [vmem:[%s221 + $0x130] sm:$0xff] %v519
        %648 = vst [vmem:[%s221 + $0x138] sm:$0xff] %v520
        %649 = vst [vmem:[%s221 + $0x140] sm:$0xff] %v521
        %650 = vst [vmem:[%s221 + $0x148] sm:$0xff] %v522
        %651 = vst [vmem:[%s221 + $0x150] sm:$0xff] %v523
        %652 = vst [vmem:[%s221 + $0x158] sm:$0xff] %v524
        %653 = vst [vmem:[%s221 + $0x160] sm:$0xff] %v525
        %654 = vst [vmem:[%s221 + $0x168] sm:$0xff] %v526
        %655 = vst [vmem:[%s221 + $0x170] sm:$0xff] %v527
        %656 = vst [vmem:[%s221 + $0x178] sm:$0xff] %v528
        %657 = vst [vmem:[%s221 + $0x180] sm:$0xff] %v529
        %658 = vst [vmem:[%s221 + $0x188] sm:$0xff] %v530
        %659 = vst [vmem:[%s221 + $0x190] sm:$0xff] %v531
        %660 = vst [vmem:[%s221 + $0x198] sm:$0xff] %v532
        %661 = vst [vmem:[%s221 + $0x1a0] sm:$0xff] %v533
        %662 = vst [vmem:[%s221 + $0x1a8] sm:$0xff] %v534
        %663 = vst [vmem:[%s221 + $0x1b0] sm:$0xff] %v535
        %664 = vst [vmem:[%s221 + $0x1b8] sm:$0xff] %v536
        %665 = vst [vmem:[%s221 + $0x1c0] sm:$0xff] %v537
        %666 = vst [vmem:[%s221 + $0x1c8] sm:$0xff] %v538
        %667 = vst [vmem:[%s221 + $0x1d0] sm:$0xff] %v539
        %668 = vst [vmem:[%s221 + $0x1d8] sm:$0xff] %v540
        %669 = vst [vmem:[%s221 + $0x1e0] sm:$0xff] %v541
        %670 = vst [vmem:[%s221 + $0x1e8] sm:$0xff] %v542
        %671 = vst [vmem:[%s221 + $0x1f0] sm:$0xff] %v543
        %672 = vst [vmem:[%s221 + $0x1f8] sm:$0xff] %v544
        %673 = vst [vmem:[%s221 + $0x200] sm:$0xff] %v545
        %674 = vst [vmem:[%s221 + $0x208] sm:$0xff] %v546
        %675 = vst [vmem:[%s221 + $0x210] sm:$0xff] %v547
        %676 = vst [vmem:[%s221 + $0x218] sm:$0xff] %v548
        %677 = vst [vmem:[%s221 + $0x220] sm:$0xff] %v549
        %678 = vst [vmem:[%s221 + $0x228] sm:$0xff] %v550
        %679 = vst [vmem:[%s221 + $0x230] sm:$0xff] %v551
        %680 = vst [vmem:[%s221 + $0x238] sm:$0xff] %v552
        %681 = vst [vmem:[%s221 + $0x240] sm:$0xff] %v553
        %682 = vst [vmem:[%s221 + $0x248] sm:$0xff] %v554
        %683 = vst [vmem:[%s221 + $0x250] sm:$0xff] %v555
        %684 = vst [vmem:[%s221 + $0x258] sm:$0xff] %v556
        %685 = vst [vmem:[%s221 + $0x260] sm:$0xff] %v557
        %686 = vst [vmem:[%s221 + $0x268] sm:$0xff] %v558
        %687 = vst [vmem:[%s221 + $0x270] sm:$0xff] %v559
        %688 = vst [vmem:[%s221 + $0x278] sm:$0xff] %v560
        %689 = vst [vmem:[%s221 + $0x280] sm:$0xff] %v561
        %690 = vst [vmem:[%s221 + $0x288] sm:$0xff] %v562
        %691 = vst [vmem:[%s221 + $0x290] sm:$0xff] %v563
        %692 = vst [vmem:[%s221 + $0x298] sm:$0xff] %v564
        %693 = vst [vmem:[%s221 + $0x2a0] sm:$0xff] %v565
        %694 = vst [vmem:[%s221 + $0x2a8] sm:$0xff] %v566
        %695 = vst [vmem:[%s221 + $0x2b0] sm:$0xff] %v567
        %696 = vst [vmem:[%s221 + $0x2b8] sm:$0xff] %v568
        %697 = vst [vmem:[%s221 + $0x2c0] sm:$0xff] %v569
        %698 = vst [vmem:[%s221 + $0x2c8] sm:$0xff] %v570
        %699 = vst [vmem:[%s221 + $0x2d0] sm:$0xff] %v571
        %700 = vst [vmem:[%s221 + $0x2d8] sm:$0xff] %v572
        %701 = vst [vmem:[%s221 + $0x2e0] sm:$0xff] %v573
        %702 = vst [vmem:[%s221 + $0x2e8] sm:$0xff] %v574
        %703 = vst [vmem:[%s221 + $0x2f0] sm:$0xff] %v575
        %704 = vst [vmem:[%s221 + $0x2f8] sm:$0xff] %v576
        %705 = vst [vmem:[%s221 + $0x300] sm:$0xff] %v577
        %706 = vst [vmem:[%s221 + $0x308] sm:$0xff] %v578
        %707 = vst [vmem:[%s221 + $0x310] sm:$0xff] %v579
        %708 = vst [vmem:[%s221 + $0x318] sm:$0xff] %v580
        %709 = vst [vmem:[%s221 + $0x320] sm:$0xff] %v581
        %710 = vst [vmem:[%s221 + $0x328] sm:$0xff] %v582
        %711 = vst [vmem:[%s221 + $0x330] sm:$0xff] %v583
        %712 = vst [vmem:[%s221 + $0x338] sm:$0xff] %v584
        %713 = vst [vmem:[%s221 + $0x340] sm:$0xff] %v585
        %714 = vst [vmem:[%s221 + $0x348] sm:$0xff] %v586
        %715 = vst [vmem:[%s221 + $0x350] sm:$0xff] %v587
        %716 = vst [vmem:[%s221 + $0x358] sm:$0xff] %v588
        %717 = vst [vmem:[%s221 + $0x360] sm:$0xff] %v589
        %718 = vst [vmem:[%s221 + $0x368] sm:$0xff] %v590
        %719 = vst [vmem:[%s221 + $0x370] sm:$0xff] %v591
        %720 = vst [vmem:[%s221 + $0x378] sm:$0xff] %v592
        %721 = vst [vmem:[%s221 + $0x380] sm:$0xff] %v593
        %722 = vst [vmem:[%s221 + $0x388] sm:$0xff] %v594
        %723 = vst [vmem:[%s221 + $0x390] sm:$0xff] %v595
        %724 = vst [vmem:[%s221 + $0x398] sm:$0xff] %v596
        %725 = vst [vmem:[%s221 + $0x3a0] sm:$0xff] %v597
        %726 = vst [vmem:[%s221 + $0x3a8] sm:$0xff] %v598
        %727 = vst [vmem:[%s221 + $0x3b0] sm:$0xff] %v599
        %728 = vst [vmem:[%s221 + $0x3b8] sm:$0xff] %v600
        %729 = vst [vmem:[%s221 + $0x3c0] sm:$0xff] %v601
        %730 = vst [vmem:[%s221 + $0x3c8] sm:$0xff] %v602
        %731 = vst [vmem:[%s221 + $0x3d0] sm:$0xff] %v603
        %732 = vst [vmem:[%s221 + $0x3d8] sm:$0xff] %v604
        %733 = vst [vmem:[%s221 + $0x3e0] sm:$0xff] %v605
        %734 = vst [vmem:[%s221 + $0x3e8] sm:$0xff] %v606
        %735 = vst [vmem:[%s221 + $0x3f0] sm:$0xff] %v607
        %736 = vst [vmem:[%s221 + $0x3f8] sm:$0xff] %v608
        %s737 = sand.u32 %s98, 1
        %s738 = scalar_lea.sflag [#allocation4], %s737
        %s739 = sand.u32 %s98, 1
        %s740 = smul.addr %s739, 1024
        %s741 = scalar_lea.vmem [#allocation7], %s740
        // Predicated region
        $region37: #{tpu_custom_call.1} parent=27 // pred_check
          %p742 = pneg %p108
        $region38: #{tpu_custom_call.1} parent=27 // pred_check_branch
          %744 = sbr.rel (%p742) target = $region40
        $region39: #{tpu_custom_call.1} parent=27 // pred_region
          %s745 = smul.u32 32, %s26
          %s747 = ssub.s32 16384, 16384
          %748 = vsyncadd %s738, %s747
          %s749 = smul.addr %s745, 4
          %s750 = smul.addr %s27, 256
          %s751 = sadd.s32 %s749, %s750
          %s752 = smul.addr %s751, 128
          %s753 = scalar_lea.hbm %s2, %s752
          %s754 = sshll.u32 %s741, 4
          %s755 = int_to_ptr.vmem [resolvable:$true] %s754
          %760 = dma.vmem_to_hbm [thread:$0]  %s755, 16384, %s753, %s738, 512, 512, 32
        $region40: #{tpu_custom_call.1} parent=27 // pred_fallthru
          _
      $region28: #{tpu_custom_call.1} parent=5 // pred_fallthru
        _
      %p761 = scmp.le.s32.totalorder 2, %s17
      // Predicated region
      $region41: #{tpu_custom_call.1} parent=5 // pred_check
        %p762 = pneg %p761
      $region42: #{tpu_custom_call.1} parent=5 // pred_check_branch
        %764 = sbr.rel (%p762) target = $region44
      $region43: #{tpu_custom_call.1} parent=5 // pred_region
        %s765 = ssub.s32 %s17, 2
        // Predicated region
        $region45: #{tpu_custom_call.1} parent=43 // pred_check
          %p766 = pneg %p114
        $region46: #{tpu_custom_call.1} parent=43 // pred_check_branch
          %768 = sbr.rel (%p766) target = $region48
        $region47: #{tpu_custom_call.1} parent=43 // pred_region
          %s769 = sand.u32 %s99, 1
          %s770 = scalar_lea.sflag [#allocation4], %s769
          %s771 = sand.u32 %s99, 1
          %s772 = smul.addr %s771, 1024
          %s773 = scalar_lea.vmem [#allocation7], %s772
          %774 = dma.done %s770, 16384
        $region48: #{tpu_custom_call.1} parent=43 // pred_fallthru
          _
      $region44: #{tpu_custom_call.1} parent=5 // pred_fallthru
        _
    $region6: #{tpu_custom_call.1} parent=1 // loop_footer
      %s21 = sadd.s32 1, %s17
    $region7: #{tpu_custom_call.1} parent=1 // loop_footer_branch
      %16 = sbr.rel target = $region3
    $region8: #{tpu_custom_call.1} parent=1 // loop_exit
      _
    %775 = vsyncpa [#allocation3], 1
    %s776 = scalar_lea.sflag [#allocation3], 1
    %777 = vsyncpa %s776, 1
    %778 = vsyncpa [#allocation6], 1
    %s779 = scalar_lea.sflag [#allocation6], 1
    %780 = vsyncpa %s779, 1
    %781 = vsyncpa [#allocation4], 1
    %s782 = scalar_lea.sflag [#allocation4], 1
    %783 = vsyncpa %s782, 1

</llo_original>
